<compile_context>
chip_gen: v5e
topology: v5e:2x2
jax: 0.10.0
libtpu: 0.0.40
codegen_flags: <defaults>
</compile_context>

<pallas_src>
import functools
import math

import jax
import jax.numpy as jnp
from jax.experimental import pallas as pl
from jax.experimental.pallas import tpu as pltpu


def _round_up(v, m):
    return (v + m - 1) // m * m


def _vmem_capacity_bytes():
    # Hardware query only (not masking kernel errors); conservative fallback
    # is the smallest known capacity (v7x, 64 MiB per TensorCore).
    try:
        return int(pltpu.get_tpu_info().vmem_capacity_bytes)
    except Exception:  # pragma: no cover
        return 64 * 1024 * 1024


# Narrow fallback-error set for the single-buffered-weights capability probe.
_FALLBACK_ERRORS = tuple(
    err for err in (
        getattr(pltpu, "LoweringException", None),
        getattr(jax.errors, "JaxRuntimeError", None),
        NotImplementedError,
        ValueError,
        TypeError,
    ) if isinstance(err, type) and issubclass(err, BaseException))


def _gelu(h, approx):
    if approx:
        # tanh approximation rides the EUP slot (nearly free VLIW slot);
        # numerics differ slightly from torch's exact GELU -> opt-in only.
        return jax.nn.gelu(h, approximate=True)
    return 0.5 * h * (1.0 + jax.lax.erf(h * (1.0 / math.sqrt(2.0))))


# ---------------------------------------------------------------------------
# Kernels
# ---------------------------------------------------------------------------

def _rezero_ffn_resident_kernel(x_ref, w1_ref, b1_ref, w2_ref, b2_ref, g_ref,
                                o_ref, *, approx_gelu):
    """Whole hidden dim resident (nh == 1): no accumulator scratch."""
    # x_ref: (tm, Dp)  w1_ref: (Dp, Hp)  b1_ref: (1, Hp)
    # w2_ref: (Hp, Dp) b2_ref: (1, Dp)   g_ref: (1,) in SMEM
    h = jnp.dot(x_ref[...], w1_ref[...], preferred_element_type=jnp.float32)
    h = h + b1_ref[...]
    h = _gelu(h, approx_gelu)
    # Dropout(p=0.0) is the identity.
    out = jnp.dot(h.astype(w2_ref.dtype), w2_ref[...],
                  preferred_element_type=jnp.float32)
    # ReZero gate: scale the whole branch by the scalar g.
    o_ref[...] = ((out + b2_ref[...]) * g_ref[0]).astype(o_ref.dtype)


def _rezero_ffn_streamed_kernel(x_ref, w1_ref, b1_ref, w2_ref, b2_ref, g_ref,
                                o_ref, acc_ref, *, approx_gelu):
    """Hidden dim streamed over grid axis 1 with an f32 accumulator."""
    # x_ref: (tm, Dp)  w1_ref: (Dp, th)  b1_ref: (1, th)
    # w2_ref: (th, Dp) b2_ref: (1, Dp)   acc_ref: (tm, Dp) f32 scratch
    k = pl.program_id(1)

    h = jnp.dot(x_ref[...], w1_ref[...], preferred_element_type=jnp.float32)
    h = h + b1_ref[...]
    h = _gelu(h, approx_gelu)
    contrib = jnp.dot(h.astype(w2_ref.dtype), w2_ref[...],
                      preferred_element_type=jnp.float32)

    @pl.when(k == 0)
    def _first():
        acc_ref[...] = contrib          # direct assign: no zero-init pass

    @pl.when(k != 0)
    def _rest():
        acc_ref[...] += contrib

    @pl.when(k == pl.num_programs(1) - 1)
    def _finalize():
        o_ref[...] = ((acc_ref[...] + b2_ref[...]) * g_ref[0]).astype(o_ref.dtype)


# ---------------------------------------------------------------------------
# Wrapper
# ---------------------------------------------------------------------------

def pad_params(w1, b1, w2, b2):
    """Zero-pad FFN params to lane-dense (128-multiple) shapes.

    Call once at init and cache the result to avoid per-call padding ops
    (zeros are numerically inert through this FFN)."""
    D, H = w1.shape
    Dp, Hp = _round_up(D, 128), _round_up(H, 128)
    if (Dp, Hp) != (D, H):
        w1 = jnp.pad(w1, ((0, Dp - D), (0, Hp - H)))
        b1 = jnp.pad(b1, (0, Hp - H))
        w2 = jnp.pad(w2, ((0, Hp - H), (0, Dp - D)))
        b2 = jnp.pad(b2, (0, Dp - D))
    return w1, b1, w2, b2


def rezero_feed_forward(x, w1, b1, w2, b2, g, *, tm=None, th=None,
                        approx_gelu=False):
    """ReZero(FeedForward)(x) = (GELU(x@w1+b1) @ w2 + b2) * g.

    x: (B, S, D). w1: (D, H), b1: (H,), w2: (H, D), b2: (D,), g: (1,) scalar.
    Weights are stored (in, out), i.e. transposed vs torch nn.Linear.weight.
    Params may be pre-padded with pad_params() (cached) to skip per-call pads.
    """
    B, S, D = x.shape
    dtype = x.dtype
    M = B * S

    x_isz = jnp.dtype(dtype).itemsize
    w_isz = jnp.dtype(w1.dtype).itemsize
    sub = 8 * max(1, 4 // x_isz)               # sublane multiple: 8 f32 / 16 bf16

    # ---- lane-dense padded params (no-op if already padded by the caller) --
    w1p, b1p, w2p, b2p = pad_params(w1, b1, w2, b2)
    Dp, Hp = w1p.shape
    assert Dp == _round_up(D, 128), (D, Dp)
    b1p = b1p.reshape(1, Hp)
    b2p = b2p.reshape(1, Dp)
    g1 = jnp.asarray(g, jnp.float32).reshape(1)

    # ---- generation-aware VMEM budgets ------------------------------------
    vmem_cap = _vmem_capacity_bytes()          # 128 MiB v5e/v6e, 64 MiB v7x
    weight_budget = (vmem_cap * 5) // 8        # ~80 MiB / ~40 MiB resident weights
    vmem_ceiling = vmem_cap - (8 << 20)        # leave compiler headroom

    # ---- hidden tile: keep weights resident if they fit, else stream H ----
    if th is None:
        th = Hp
        if 2 * Dp * Hp * w_isz > weight_budget:
            # streamed weight tiles are double-buffered: 2 bufs * 2 weights
            # keep th a 256-multiple and >= 512 so the 256-wide MXU stays full
            while (4 * Dp * th * w_isz > weight_budget
                   and th % 2 == 0 and (th // 2) >= 512
                   and (th // 2) % 256 == 0):
                th //= 2
    assert Hp % th == 0 and th % 128 == 0, (Hp, th)
    nh = Hp // th
    has_buffered = hasattr(pl, "Buffered")

    # ---- row tile ----------------------------------------------------------
    if tm is None:
        if nh == 1:
            tm = 512 if x_isz <= 2 else 256
            # guarantee >= 2 row tiles so the 'parallel' axis can feed both
            # v7x TensorCores even for short sequences
            if M > sub:
                tm = min(tm, _round_up(-(-M // 2), sub))
        else:
            # streamed weights: amortize the nm x full-weight re-reads so the
            # kernel stays MXU-bound rather than HBM-bound
            tm = 1024 if x_isz <= 2 else 512
    tm = _round_up(min(tm, _round_up(M, sub)), sub)

    def plan_bytes(tm_, wbuf_):
        # includes the inter-matmul intermediate h (f32) + astype copy when
        # weights are sub-32-bit
        h_bytes = tm_ * th * 4 + (tm_ * th * w_isz if w_isz != 4 else 0)
        total = (2 * tm_ * Dp * x_isz              # x blocks (double-buffered)
                 + 2 * tm_ * Dp * x_isz            # out blocks
                 + wbuf_ * 2 * Dp * th * w_isz     # w1 + w2 blocks
                 + 2 * 8 * (th + Dp) * w_isz       # biases (sublane-padded)
                 + h_bytes)
        if nh > 1:
            total += tm_ * Dp * 4                  # f32 accumulator scratch
        return total

    wbuf = 1 if (nh == 1 and has_buffered) else 2
    # shrink tm until the whole plan (incl. h intermediate) fits VMEM
    while plan_bytes(tm, wbuf) > vmem_ceiling and tm > sub:
        tm = max(sub, _round_up(tm // 2, sub))

    Mp = _round_up(M, tm)
    nm = Mp // tm

    x2d = x.reshape(M, D)
    if Mp != M or Dp != D:
        x2d = jnp.pad(x2d, ((0, Mp - M), (0, Dp - D)))

    cost = pl.CostEstimate(
        flops=4 * Mp * Dp * Hp,                    # two matmuls
        transcendentals=Mp * Hp,                   # erf/tanh per hidden act
        bytes_accessed=int(
            Mp * Dp * x_isz                                   # x
            + (nm if nh > 1 else 1) * 2 * Dp * Hp * w_isz     # weight (re-)reads
            + (Hp + Dp) * w_isz                               # biases
            + Mp * Dp * x_isz),                               # out
    )

    def build(single_buffer_weights):
        wbuf_ = 1 if (single_buffer_weights and nh == 1) else 2
        vmem_limit = int(min(max(plan_bytes(tm, wbuf_) * 5 // 4 + (2 << 20),
                                 16 << 20),
                             vmem_ceiling))
        const = pl.Buffered(1) if single_buffer_weights else None

        if nh == 1:
            in_specs = [
                pl.BlockSpec((tm, Dp), lambda i: (i, 0)),                        # x
                pl.BlockSpec((Dp, th), lambda i: (0, 0), pipeline_mode=const),   # w1
                pl.BlockSpec((1, th), lambda i: (0, 0), pipeline_mode=const),    # b1
                pl.BlockSpec((th, Dp), lambda i: (0, 0), pipeline_mode=const),   # w2
                pl.BlockSpec((1, Dp), lambda i: (0, 0), pipeline_mode=const),    # b2
                pl.BlockSpec(memory_space=pltpu.MemorySpace.SMEM),               # g
            ]
            return pl.pallas_call(
                functools.partial(_rezero_ffn_resident_kernel,
                                  approx_gelu=approx_gelu),
                out_shape=jax.ShapeDtypeStruct((Mp, Dp), dtype),
                grid_spec=pltpu.PrefetchScalarGridSpec(
                    num_scalar_prefetch=0,
                    grid=(nm,),
                    in_specs=in_specs,
                    out_specs=pl.BlockSpec((tm, Dp), lambda i: (i, 0)),
                ),
                compiler_params=pltpu.CompilerParams(
                    dimension_semantics=("parallel",),
                    vmem_limit_bytes=vmem_limit),
                cost_estimate=cost,
            )

        in_specs = [
            pl.BlockSpec((tm, Dp), lambda i, k: (i, 0)),                       # x
            pl.BlockSpec((Dp, th), lambda i, k: (0, k)),                       # w1
            pl.BlockSpec((1, th), lambda i, k: (0, k)),                        # b1
            pl.BlockSpec((th, Dp), lambda i, k: (k, 0)),                       # w2
            pl.BlockSpec((1, Dp), lambda i, k: (0, 0), pipeline_mode=const),   # b2
            pl.BlockSpec(memory_space=pltpu.MemorySpace.SMEM),                 # g
        ]
        return pl.pallas_call(
            functools.partial(_rezero_ffn_streamed_kernel,
                              approx_gelu=approx_gelu),
            out_shape=jax.ShapeDtypeStruct((Mp, Dp), dtype),
            grid_spec=pltpu.PrefetchScalarGridSpec(
                num_scalar_prefetch=0,
                grid=(nm, nh),
                in_specs=in_specs,
                out_specs=pl.BlockSpec((tm, Dp), lambda i, k: (i, 0)),
                scratch_shapes=[pltpu.VMEM((tm, Dp), jnp.float32)],
            ),
            compiler_params=pltpu.CompilerParams(
                dimension_semantics=("parallel", "arbitrary"),
                vmem_limit_bytes=vmem_limit),
            cost_estimate=cost,
        )

    if has_buffered:
        try:
            out2d = build(True)(x2d, w1p, b1p, w2p, b2p, g1)
        except _FALLBACK_ERRORS:
            # Narrow fallback: this jax build rejects single-buffered
            # pipeline_mode; rebuild with default (double) buffering and a
            # VMEM limit re-derived for double-buffered weights.
            out2d = build(False)(x2d, w1p, b1p, w2p, b2p, g1)
    else:
        out2d = build(False)(x2d, w1p, b1p, w2p, b2p, g1)

    if Mp != M or Dp != D:
        out2d = out2d[:M, :D]
    return out2d.reshape(B, S, D)


# ---------------------------------------------------------------------------
# Reference + init
# ---------------------------------------------------------------------------

def init_params(key, dim, mult=4, dtype=jnp.float32):
    """Deterministic torch-nn.Linear-style init (uniform +/- 1/sqrt(fan_in))."""
    hidden = dim * mult
    k1, k2, k3, k4 = jax.random.split(key, 4)
    bound1 = 1.0 / math.sqrt(dim)
    bound2 = 1.0 / math.sqrt(hidden)
    # stored as (in, out) = transpose of torch's (out, in) weight
    w1 = jax.random.uniform(k1, (dim, hidden), dtype, -bound1, bound1)
    b1 = jax.random.uniform(k2, (hidden,), dtype, -bound1, bound1)
    w2 = jax.random.uniform(k3, (hidden, dim), dtype, -bound2, bound2)
    b2 = jax.random.uniform(k4, (dim,), dtype, -bound2, bound2)
    return w1, b1, w2, b2


def rezero_feed_forward_ref(x, w1, b1, w2, b2, g):
    h = jnp.einsum("bsd,dh->bsh", x, w1) + b1
    h = 0.5 * h * (1.0 + jax.lax.erf(h / math.sqrt(2.0)))
    return (jnp.einsum("bsh,hd->bsd", h, w2) + b2) * g[0]


if __name__ == "__main__":
    key = jax.random.PRNGKey(0)
    kx, kp = jax.random.split(key)

    B, S, dim, mult = 2, 16, 64, 4            # hidden = 256, M = 32 tokens
    x = jax.random.normal(kx, (B, S, dim), dtype=jnp.float32)
    w1, b1, w2, b2 = init_params(kp, dim, mult)

    # torch init: g = zeros(1)  ->  ReZero branch output is exactly zero.
    g0 = jnp.zeros((1,), jnp.float32)
    out0 = jax.block_until_ready(rezero_feed_forward(x, w1, b1, w2, b2, g0))
    assert out0.shape == (B, S, dim)
    assert jnp.allclose(out0, 0.0), "g=0 must zero the ReZero branch"

    # non-zero gate: resident-weight fast path (nh == 1, no accumulator).
    g = jnp.asarray([0.7], jnp.float32)
    out = jax.block_until_ready(rezero_feed_forward(x, w1, b1, w2, b2, g))
    ref = rezero_feed_forward_ref(x, w1, b1, w2, b2, g)
    assert out.shape == (B, S, dim)
    assert jnp.allclose(out, ref, atol=5e-5, rtol=5e-5), "mismatch vs reference"

    # streamed-hidden path: 4 row tiles x 2 hidden tiles with the f32
    # accumulator (assign-at-k==0), plus the D=64 -> Dp=128 padding path.
    out_t = jax.block_until_ready(
        rezero_feed_forward(x, w1, b1, w2, b2, g, tm=8, th=128))
    assert jnp.allclose(out_t, ref, atol=5e-5, rtol=5e-5), "tiled mismatch"

    # pre-padded (cached) params skip the per-call pad ops entirely.
    out_p = jax.block_until_ready(
        rezero_feed_forward(x, *pad_params(w1, b1, w2, b2), g))
    assert jnp.allclose(out_p, ref, atol=5e-5, rtol=5e-5), "padded-params mismatch"

    print("KERNEL_OK")
</pallas_src>

<mosaic_0001>
module attributes {stable_mosaic.version = 11 : i64} {
  func.func @_rezero_ffn_resident_kernel(%arg0: i32, %arg1: memref<16x128xf32, #tpu.memory_space<vmem>>, %arg2: memref<128x256xf32, #tpu.memory_space<vmem>>, %arg3: memref<1x256xf32, #tpu.memory_space<vmem>>, %arg4: memref<256x128xf32, #tpu.memory_space<vmem>>, %arg5: memref<1x128xf32, #tpu.memory_space<vmem>>, %arg6: memref<1xf32, #tpu.memory_space<smem>>, %arg7: memref<16x128xf32, #tpu.memory_space<vmem>>) attributes {dimension_semantics = [#tpu.dimension_semantics<parallel>], iteration_bounds = array<i64: 2>, scalar_prefetch = 0 : i64, scratch_operands = 0 : i64, tpu.core_type = #tpu.core_type<tc>, window_params = [{transform_indices = @transform_0, window_bounds = array<i64: 16, 128>}, {pipeline_mode = #tpu.pipeline_mode<synchronous>, transform_indices = @transform_1, window_bounds = array<i64: 128, 256>}, {pipeline_mode = #tpu.pipeline_mode<synchronous>, transform_indices = @transform_2, window_bounds = array<i64: 1, 256>}, {pipeline_mode = #tpu.pipeline_mode<synchronous>, transform_indices = @transform_3, window_bounds = array<i64: 256, 128>}, {pipeline_mode = #tpu.pipeline_mode<synchronous>, transform_indices = @transform_4, window_bounds = array<i64: 1, 128>}, {transform_indices = @transform_5, window_bounds = array<i64: 1>}, {transform_indices = @transform_6, window_bounds = array<i64: 16, 128>}]} {
    %c0 = arith.constant 0 : index
    %c0_0 = arith.constant 0 : index
    %0 = vector.load %arg1[%c0, %c0_0] : memref<16x128xf32, #tpu.memory_space<vmem>>, vector<16x128xf32>
    %c0_1 = arith.constant 0 : index
    %c0_2 = arith.constant 0 : index
    %1 = vector.load %arg2[%c0_1, %c0_2] : memref<128x256xf32, #tpu.memory_space<vmem>>, vector<128x256xf32>
    %cst = arith.constant dense<0.000000e+00> : vector<16x256xf32>
    %2 = tpu.matmul %0, %1, %cst {dimension_numbers = #tpu.dot_dimension_numbers<[1], [0], [0], [1], [0, 0, 1, 1], [], []>} : vector<16x128xf32>, vector<128x256xf32>, vector<16x256xf32> -> vector<16x256xf32>
    %c0_3 = arith.constant 0 : index
    %c0_4 = arith.constant 0 : index
    %3 = vector.load %arg3[%c0_3, %c0_4] : memref<1x256xf32, #tpu.memory_space<vmem>>, vector<1x256xf32>
    %4 = vector.broadcast %3 : vector<1x256xf32> to vector<16x256xf32>
    %5 = arith.addf %2, %4 : vector<16x256xf32>
    %cst_5 = arith.constant 5.000000e-01 : f32
    %6 = vector.broadcast %cst_5 : f32 to vector<16x256xf32>
    %7 = arith.mulf %6, %5 : vector<16x256xf32>
    %cst_6 = arith.constant 0.707106769 : f32
    %8 = vector.broadcast %cst_6 : f32 to vector<16x256xf32>
    %9 = arith.mulf %5, %8 : vector<16x256xf32>
    %10 = math.erf %9 : vector<16x256xf32>
    %cst_7 = arith.constant 1.000000e+00 : f32
    %11 = vector.broadcast %cst_7 : f32 to vector<16x256xf32>
    %12 = arith.addf %11, %10 : vector<16x256xf32>
    %13 = arith.mulf %7, %12 : vector<16x256xf32>
    %c0_8 = arith.constant 0 : index
    %c0_9 = arith.constant 0 : index
    %14 = vector.load %arg4[%c0_8, %c0_9] : memref<256x128xf32, #tpu.memory_space<vmem>>, vector<256x128xf32>
    %cst_10 = arith.constant dense<0.000000e+00> : vector<16x128xf32>
    %15 = tpu.matmul %13, %14, %cst_10 {dimension_numbers = #tpu.dot_dimension_numbers<[1], [0], [0], [1], [0, 0, 1, 1], [], []>} : vector<16x256xf32>, vector<256x128xf32>, vector<16x128xf32> -> vector<16x128xf32>
    %c0_11 = arith.constant 0 : index
    %c0_12 = arith.constant 0 : index
    %16 = vector.load %arg5[%c0_11, %c0_12] : memref<1x128xf32, #tpu.memory_space<vmem>>, vector<1x128xf32>
    %17 = vector.broadcast %16 : vector<1x128xf32> to vector<16x128xf32>
    %18 = arith.addf %15, %17 : vector<16x128xf32>
    %c0_13 = arith.constant 0 : index
    %19 = memref.load %arg6[%c0_13] : memref<1xf32, #tpu.memory_space<smem>>
    %20 = vector.broadcast %19 : f32 to vector<16x128xf32>
    %21 = arith.mulf %18, %20 : vector<16x128xf32>
    %c0_14 = arith.constant 0 : index
    %c0_15 = arith.constant 0 : index
    %22 = vector.load %arg7[%c0_14, %c0_15] : memref<16x128xf32, #tpu.memory_space<vmem>>, vector<16x128xf32>
    tpu.vector_store %arg7[%c0_14, %c0_15], %21 {strides = array<i32>} : memref<16x128xf32, #tpu.memory_space<vmem>>, vector<16x128xf32>,
    return
  }
  func.func @transform_0(%arg0: i32) -> (i32, i32) {
    %c0_i32 = arith.constant 0 : i32
    %c0_i32_0 = arith.constant 0 : i32
    return %arg0, %c0_i32 : i32, i32
  }
  func.func @transform_1(%arg0: i32) -> (i32, i32) {
    %c0_i32 = arith.constant 0 : i32
    %c0_i32_0 = arith.constant 0 : i32
    %c0_i32_1 = arith.constant 0 : i32
    return %c0_i32, %c0_i32_0 : i32, i32
  }
  func.func @transform_2(%arg0: i32) -> (i32, i32) {
    %c0_i32 = arith.constant 0 : i32
    %c0_i32_0 = arith.constant 0 : i32
    %c0_i32_1 = arith.constant 0 : i32
    return %c0_i32, %c0_i32_0 : i32, i32
  }
  func.func @transform_3(%arg0: i32) -> (i32, i32) {
    %c0_i32 = arith.constant 0 : i32
    %c0_i32_0 = arith.constant 0 : i32
    %c0_i32_1 = arith.constant 0 : i32
    return %c0_i32, %c0_i32_0 : i32, i32
  }
  func.func @transform_4(%arg0: i32) -> (i32, i32) {
    %c0_i32 = arith.constant 0 : i32
    %c0_i32_0 = arith.constant 0 : i32
    %c0_i32_1 = arith.constant 0 : i32
    return %c0_i32, %c0_i32_0 : i32, i32
  }
  func.func @transform_5(%arg0: i32) -> i32 {
    %c0_i32 = arith.constant 0 : i32
    %c0_i32_0 = arith.constant 0 : i32
    return %c0_i32 : i32
  }
  func.func @transform_6(%arg0: i32) -> (i32, i32) {
    %c0_i32 = arith.constant 0 : i32
    %c0_i32_0 = arith.constant 0 : i32
    return %arg0, %c0_i32 : i32, i32
  }
}

</mosaic_0001>

<llo_original>
// kernel: tpu_custom_call.1
$region0: #{tpu_custom_call.1}
  #allocation0 [shape = 'u32[]', space=smem, size = 0x4, offset = 0x4, fixed_abs, tag = 'smem constant byte address 0x4 - core index']
  #allocation1 [shape = 'u32[72,128]{1,0:T(1,128)}', space=vmem, size = 0x9000, scoped, tag = 'internal scratch']
  #allocation2 [shape = 'f32[1]{0:T(128)S(6)}', space=smem, size = 0x200, scoped, tag = 'scoped memory for tpu_custom_call.1']
  %s0 = inlined_call_operand.hbm [shape: f32[32,128], index: 0, kind: input, shape index: {}]
  %s1 = inlined_call_operand.hbm [shape: f32[128,256], index: 1, kind: input, shape index: {}]
  %s2 = inlined_call_operand.vmem [shape: f32[1,256], index: 2, kind: input, shape index: {}]
  %s3 = inlined_call_operand.hbm [shape: f32[256,128], index: 3, kind: input, shape index: {}]
  %s4 = inlined_call_operand.vmem [shape: f32[1,128], index: 4, kind: input, shape index: {}]
  %s5 = inlined_call_operand.<no memory space> [shape: f32[1], index: 5, kind: input, shape index: {}]
  %s6 = inlined_call_operand.hbm [shape: f32[32,128], index: 6, kind: output, shape index: {}]
  %s7 = sld [smem:[#allocation0]]
  $region69: #{tpu_custom_call.1} parent=0
    _
  %s9 = ssub.s32 1, %s7
  %s10 = scalar_select 0, %s9, %s7
  %11 = sst [smem:[#allocation2]] %s5
  $region1: #{tpu_custom_call.1} parent=0
    #allocation3 [shape = 'u8[16384]{0}', space=vmem, size = 0x4000, scoped, tag = 'input window, operand 0']
    #allocation4 [shape = 's32[2]{0}', space=sflag, size = 0x8, scoped, tag = 'scoped memory for tpu_custom_call.1']
    #allocation5 [shape = 's32[2]{0}', space=sflag, size = 0x8, scoped, tag = 'scoped memory for tpu_custom_call.1']
    #allocation6 [shape = 'u8[131072]{0}', space=vmem, size = 0x20000, scoped, tag = 'input window, operand 1, single buffered']
    #allocation7 [shape = 's32[1]{0}', space=sflag, size = 0x4, scoped, tag = 'scoped memory for tpu_custom_call.1']
    #allocation8 [shape = 'u8[131072]{0}', space=vmem, size = 0x20000, scoped, tag = 'input window, operand 3, single buffered']
    #allocation9 [shape = 'u8[16384]{0}', space=vmem, size = 0x4000, scoped, tag = 'output window, operand 0']
    %12 = vsyncpa [#allocation4], 0
    %s13 = scalar_lea.sflag [#allocation4], 1
    %14 = vsyncpa %s13, 0
    %15 = vsyncpa [#allocation7], 0
    %16 = vsyncpa [#allocation5], 0
    %s17 = scalar_lea.sflag [#allocation5], 1
    %18 = vsyncpa %s17, 0
    loop: start=0, step=1, limit=4
    $region2: #{tpu_custom_call.1} parent=1 // loop_pre_header
      _
    $region3: #{tpu_custom_call.1} parent=1 // loop_header
      %s20 = sphi 0, %s24
      %p21 = scmp.ge.s32.totalorder %s20, 4
      %s30 = sphi 0, %s32
      %s33 = sphi 0, %s30
      %s34 = sphi 0, %s33
      %s50 = sphi 0, %s34
      %s54 = sphi 0, %s54
      %s56 = sphi 0, %s54
      %s57 = sphi 0, %s56
      %s71 = sphi 0, %s57
      %s75 = sphi 0, %s75
      %s77 = sphi 0, %s75
      %s78 = sphi 0, %s77
      %s92 = sphi 0, %s78
      %s96 = sphi 0, %s96
      %s98 = sphi 0, %s96
      %s99 = sphi 0, %s98
      %s113 = sphi 0, %s99
      %s117 = sphi 0, %s117
      %s119 = sphi 0, %s117
      %s120 = sphi 0, %s119
      %s134 = sphi 0, %s120
      %s138 = sphi 0, %s138
      %s140 = sphi 0, %s138
      %s141 = sphi 0, %s140
      %s155 = sphi 0, %s141
      %s161 = sphi 0, %s163
      %s164 = sphi 0, %s161
      %s165 = sphi 0, %s164
      %s181 = sphi 0, %s165
    $region4: #{tpu_custom_call.1} parent=1 // loop_header_branch
      %23 = sbr.rel (%p21) target = $region8
    $region5: #{tpu_custom_call.1} parent=1 // loop_body
      %s25 = ssub.s32 %s20, 1
      %s26 = ssub.s32 %s20, 2
      %s27 = sadd.s32 %s20, 1
      %s28 = ssub.s32 %s20, %s27
      %p29 = scmp.eq.s32.totalorder %s28, 0
      %s31 = sadd.s32 %s30, 1
      %s32 = scalar_select %p29, %s30, %s31
      %p35 = pneg %p29
      %p36 = scmp.eq.s32.totalorder %s20, 1
      %p37 = por %p35, %p36
      %p38 = scmp.ne.s32.totalorder %s30, %s33
      %p39 = scmp.eq.s32.totalorder %s20, 0
      %p40 = por %p38, %p39
      %p41 = scmp.ne.s32.totalorder %s30, %s33
      %p42 = scmp.eq.s32.totalorder %s25, 1
      %p43 = por %p41, %p42
      %p44 = scmp.ne.s32.totalorder %s33, %s34
      %p45 = scmp.eq.s32.totalorder %s25, 0
      %p46 = por %p44, %p45
      %p47 = scmp.ne.s32.totalorder %s33, %s34
      %p48 = scmp.eq.s32.totalorder %s26, 1
      %p49 = por %p47, %p48
      %p51 = scmp.ne.s32.totalorder %s34, %s50
      %p52 = scmp.eq.s32.totalorder %s26, 0
      %p53 = por %p51, %p52
      %s55 = sadd.s32 %s54, 1
      %p58 = scmp.eq.s32.totalorder %s20, 1
      %p59 = scmp.ne.s32.totalorder %s54, %s56
      %p60 = scmp.eq.s32.totalorder %s20, 0
      %p61 = por %p59, %p60
      %p62 = scmp.ne.s32.totalorder %s54, %s56
      %p63 = scmp.eq.s32.totalorder %s25, 1
      %p64 = por %p62, %p63
      %p65 = scmp.ne.s32.totalorder %s56, %s57
      %p66 = scmp.eq.s32.totalorder %s25, 0
      %p67 = por %p65, %p66
      %p68 = scmp.ne.s32.totalorder %s56, %s57
      %p69 = scmp.eq.s32.totalorder %s26, 1
      %p70 = por %p68, %p69
      %p72 = scmp.ne.s32.totalorder %s57, %s71
      %p73 = scmp.eq.s32.totalorder %s26, 0
      %p74 = por %p72, %p73
      %s76 = sadd.s32 %s75, 1
      %p79 = scmp.eq.s32.totalorder %s20, 1
      %p80 = scmp.ne.s32.totalorder %s75, %s77
      %p81 = scmp.eq.s32.totalorder %s20, 0
      %p82 = por %p80, %p81
      %p83 = scmp.ne.s32.totalorder %s75, %s77
      %p84 = scmp.eq.s32.totalorder %s25, 1
      %p85 = por %p83, %p84
      %p86 = scmp.ne.s32.totalorder %s77, %s78
      %p87 = scmp.eq.s32.totalorder %s25, 0
      %p88 = por %p86, %p87
      %p89 = scmp.ne.s32.totalorder %s77, %s78
      %p90 = scmp.eq.s32.totalorder %s26, 1
      %p91 = por %p89, %p90
      %p93 = scmp.ne.s32.totalorder %s78, %s92
      %p94 = scmp.eq.s32.totalorder %s26, 0
      %p95 = por %p93, %p94
      %s97 = sadd.s32 %s96, 1
      %p100 = scmp.eq.s32.totalorder %s20, 1
      %p101 = scmp.ne.s32.totalorder %s96, %s98
      %p102 = scmp.eq.s32.totalorder %s20, 0
      %p103 = por %p101, %p102
      %p104 = scmp.ne.s32.totalorder %s96, %s98
      %p105 = scmp.eq.s32.totalorder %s25, 1
      %p106 = por %p104, %p105
      %p107 = scmp.ne.s32.totalorder %s98, %s99
      %p108 = scmp.eq.s32.totalorder %s25, 0
      %p109 = por %p107, %p108
      %p110 = scmp.ne.s32.totalorder %s98, %s99
      %p111 = scmp.eq.s32.totalorder %s26, 1
      %p112 = por %p110, %p111
      %p114 = scmp.ne.s32.totalorder %s99, %s113
      %p115 = scmp.eq.s32.totalorder %s26, 0
      %p116 = por %p114, %p115
      %s118 = sadd.s32 %s117, 1
      %p121 = scmp.eq.s32.totalorder %s20, 1
      %p122 = scmp.ne.s32.totalorder %s117, %s119
      %p123 = scmp.eq.s32.totalorder %s20, 0
      %p124 = por %p122, %p123
      %p125 = scmp.ne.s32.totalorder %s117, %s119
      %p126 = scmp.eq.s32.totalorder %s25, 1
      %p127 = por %p125, %p126
      %p128 = scmp.ne.s32.totalorder %s119, %s120
      %p129 = scmp.eq.s32.totalorder %s25, 0
      %p130 = por %p128, %p129
      %p131 = scmp.ne.s32.totalorder %s119, %s120
      %p132 = scmp.eq.s32.totalorder %s26, 1
      %p133 = por %p131, %p132
      %p135 = scmp.ne.s32.totalorder %s120, %s134
      %p136 = scmp.eq.s32.totalorder %s26, 0
      %p137 = por %p135, %p136
      %s139 = sadd.s32 %s138, 1
      %p142 = scmp.eq.s32.totalorder %s20, 1
      %p143 = scmp.ne.s32.totalorder %s138, %s140
      %p144 = scmp.eq.s32.totalorder %s20, 0
      %p145 = por %p143, %p144
      %p146 = scmp.ne.s32.totalorder %s138, %s140
      %p147 = scmp.eq.s32.totalorder %s25, 1
      %p148 = por %p146, %p147
      %p149 = scmp.ne.s32.totalorder %s140, %s141
      %p150 = scmp.eq.s32.totalorder %s25, 0
      %p151 = por %p149, %p150
      %p152 = scmp.ne.s32.totalorder %s140, %s141
      %p153 = scmp.eq.s32.totalorder %s26, 1
      %p154 = por %p152, %p153
      %p156 = scmp.ne.s32.totalorder %s141, %s155
      %p157 = scmp.eq.s32.totalorder %s26, 0
      %p158 = por %p156, %p157
      %s159 = ssub.s32 %s20, %s27
      %p160 = scmp.eq.s32.totalorder %s159, 0
      %s162 = sadd.s32 %s161, 1
      %s163 = scalar_select %p160, %s161, %s162
      %p166 = pneg %p160
      %p167 = scmp.eq.s32.totalorder %s20, 1
      %p168 = por %p166, %p167
      %p169 = scmp.ne.s32.totalorder %s161, %s164
      %p170 = scmp.eq.s32.totalorder %s20, 0
      %p171 = por %p169, %p170
      %p172 = scmp.ne.s32.totalorder %s161, %s164
      %p173 = scmp.eq.s32.totalorder %s25, 1
      %p174 = por %p172, %p173
      %p175 = scmp.ne.s32.totalorder %s164, %s165
      %p176 = scmp.eq.s32.totalorder %s25, 0
      %p177 = por %p175, %p176
      %p178 = scmp.ne.s32.totalorder %s164, %s165
      %p179 = scmp.eq.s32.totalorder %s26, 1
      %p180 = por %p178, %p179
      %p182 = scmp.ne.s32.totalorder %s165, %s181
      %p183 = scmp.eq.s32.totalorder %s26, 0
      %p184 = por %p182, %p183
      %p185 = scmp.le.s32.totalorder 1, %s20
      %p186 = scmp.lt.s32.totalorder %s20, 3
      %p187 = pnand %p185, %p186
      %p188 = pneg %p187
      // Predicated region
      $region9: #{tpu_custom_call.1} parent=5 // pred_check
        _
      $region10: #{tpu_custom_call.1} parent=5 // pred_check_branch
        %190 = sbr.rel (%p187) target = $region12
      $region11: #{tpu_custom_call.1} parent=5 // pred_region
        %s191 = ssub.s32 %s20, 1
        // Predicated region
        $region13: #{tpu_custom_call.1} parent=11 // pred_check
          %p192 = pneg %p67
        $region14: #{tpu_custom_call.1} parent=11 // pred_check_branch
          %194 = sbr.rel (%p192) target = $region16
        $region15: #{tpu_custom_call.1} parent=11 // pred_region
          %196 = vsyncadd [#allocation7], 0
          %s197 = sshll.u32 %s1, 4
          %s198 = int_to_ptr.hbm [resolvable:$true] %s197
          %s199 = sshll.u32 [#allocation6], 4
          %s200 = int_to_ptr.vmem [resolvable:$true] %s199
          %205 = dma.hbm_to_vmem [thread:$0]  %s198, 4096, %s200, [#allocation7], 256, 256, 16
        $region16: #{tpu_custom_call.1} parent=11 // pred_fallthru
          _
        // Predicated region
        $region17: #{tpu_custom_call.1} parent=11 // pred_check
          %p206 = pneg %p88
        $region18: #{tpu_custom_call.1} parent=11 // pred_check_branch
          %208 = sbr.rel (%p206) target = $region20
        $region19: #{tpu_custom_call.1} parent=11 // pred_region
          _
        $region20: #{tpu_custom_call.1} parent=11 // pred_fallthru
          _
        // Predicated region
        $region21: #{tpu_custom_call.1} parent=11 // pred_check
          %p209 = pneg %p109
        $region22: #{tpu_custom_call.1} parent=11 // pred_check_branch
          %211 = sbr.rel (%p209) target = $region24
        $region23: #{tpu_custom_call.1} parent=11 // pred_region
          %213 = vsyncadd [#allocation7], 0
          %s214 = sshll.u32 %s3, 4
          %s215 = int_to_ptr.hbm [resolvable:$true] %s214
          %s216 = sshll.u32 [#allocation8], 4
          %s217 = int_to_ptr.vmem [resolvable:$true] %s216
          %222 = dma.hbm_to_vmem [thread:$0]  %s215, 4096, %s217, [#allocation7], 128, 128, 8
        $region24: #{tpu_custom_call.1} parent=11 // pred_fallthru
          _
        // Predicated region
        $region25: #{tpu_custom_call.1} parent=11 // pred_check
          %p223 = pneg %p130
        $region26: #{tpu_custom_call.1} parent=11 // pred_check_branch
          %225 = sbr.rel (%p223) target = $region28
        $region27: #{tpu_custom_call.1} parent=11 // pred_region
          _
        $region28: #{tpu_custom_call.1} parent=11 // pred_fallthru
          _
        // Predicated region
        $region29: #{tpu_custom_call.1} parent=11 // pred_check
          %p226 = pneg %p151
        $region30: #{tpu_custom_call.1} parent=11 // pred_check_branch
          %228 = sbr.rel (%p226) target = $region32
        $region31: #{tpu_custom_call.1} parent=11 // pred_region
          _
        $region32: #{tpu_custom_call.1} parent=11 // pred_fallthru
          _
      $region12: #{tpu_custom_call.1} parent=5 // pred_fallthru
        _
      %p229 = scmp.lt.s32.totalorder %s20, 2
      // Predicated region
      $region33: #{tpu_custom_call.1} parent=5 // pred_check
        %p230 = pneg %p229
      $region34: #{tpu_custom_call.1} parent=5 // pred_check_branch
        %232 = sbr.rel (%p230) target = $region36
      $region35: #{tpu_custom_call.1} parent=5 // pred_region
        // Predicated region
        $region37: #{tpu_custom_call.1} parent=35 // pred_check
          %p233 = pneg %p40
        $region38: #{tpu_custom_call.1} parent=35 // pred_check_branch
          %235 = sbr.rel (%p233) target = $region40
        $region39: #{tpu_custom_call.1} parent=35 // pred_region
          %s236 = sand.u32 %s30, 1
          %s237 = scalar_lea.sflag [#allocation4], %s236
          %s238 = sand.u32 %s30, 1
          %s239 = smul.addr %s238, 16
          %s240 = scalar_lea.vmem [#allocation3], %s239
          %s241 = smul.u32 2, %s20
          %243 = vsyncadd %s237, 0
          %s244 = smul.addr %s241, 8
          %s245 = scalar_lea.hbm %s0, %s244
          %s246 = sshll.u32 %s245, 4
          %s247 = int_to_ptr.hbm [resolvable:$true] %s246
          %s248 = sshll.u32 %s240, 4
          %s249 = int_to_ptr.vmem [resolvable:$true] %s248
          %254 = dma.hbm_to_vmem [thread:$0]  %s247, 256, %s249, %s237, 128, 128, 8
        $region40: #{tpu_custom_call.1} parent=35 // pred_fallthru
          _
      $region36: #{tpu_custom_call.1} parent=5 // pred_fallthru
        _
      %p255 = scmp.le.s32.totalorder 1, %s20
      %p256 = scmp.lt.s32.totalorder %s20, 3
      %p257 = pnand %p255, %p256
      %p258 = pneg %p257
      // Predicated region
      $region41: #{tpu_custom_call.1} parent=5 // pred_check
        _
      $region42: #{tpu_custom_call.1} parent=5 // pred_check_branch
        %260 = sbr.rel (%p257) target = $region44
      $region43: #{tpu_custom_call.1} parent=5 // pred_region
        %s261 = ssub.s32 %s20, 1
        %s262 = sand.u32 %s33, 1
        %s263 = scalar_lea.sflag [#allocation4], %s262
        %s264 = sand.u32 %s33, 1
        %s265 = smul.addr %s264, 16
        %s266 = scalar_lea.vmem [#allocation3], %s265
        // Predicated region
        $region45: #{tpu_custom_call.1} parent=43 // pred_check
          %p267 = pneg %p46
        $region46: #{tpu_custom_call.1} parent=43 // pred_check_branch
          %269 = sbr.rel (%p267) target = $region48
        $region47: #{tpu_custom_call.1} parent=43 // pred_region
          %271 = dma.done %s263, 256
        $region48: #{tpu_custom_call.1} parent=43 // pred_fallthru
          _
        // Predicated region
        $region49: #{tpu_custom_call.1} parent=43 // pred_check
          %p272 = pneg %p67
        $region50: #{tpu_custom_call.1} parent=43 // pred_check_branch
          %274 = sbr.rel (%p272) target = $region52
        $region51: #{tpu_custom_call.1} parent=43 // pred_region
          %276 = dma.done [#allocation7], 4096
        $region52: #{tpu_custom_call.1} parent=43 // pred_fallthru
          _
        // Predicated region
        $region53: #{tpu_custom_call.1} parent=43 // pred_check
          %p277 = pneg %p109
        $region54: #{tpu_custom_call.1} parent=43 // pred_check_branch
          %279 = sbr.rel (%p277) target = $region56
        $region55: #{tpu_custom_call.1} parent=43 // pred_region
          %281 = dma.done [#allocation7], 4096
        $region56: #{tpu_custom_call.1} parent=43 // pred_fallthru
          _
        %s282 = sand.u32 %s33, 1
        %s283 = scalar_lea.sflag [#allocation4], %s282
        %s284 = sand.u32 %s33, 1
        %s285 = smul.addr %s284, 16
        %s286 = scalar_lea.vmem [#allocation3], %s285
        %p287 = pneg %p46
        %p288 = pneg %p43
        %p289 = pneg %p67
        %p290 = pneg %p64
        %p291 = pneg %p88
        %p292 = pneg %p85
        %p293 = pneg %p109
        %p294 = pneg %p106
        %p295 = pneg %p130
        %p296 = pneg %p127
        %p297 = pneg %p151
        %p298 = pneg %p148
        %p299 = pneg %p177
        %p300 = pneg %p174
        %s301 = sand.u32 %s164, 1
        %s302 = scalar_lea.sflag [#allocation5], %s301
        %s303 = sand.u32 %s164, 1
        %s304 = smul.addr %s303, 16
        %s305 = scalar_lea.vmem [#allocation9], %s304
        %s306 = smul.u32 2, %s25
        %s307 = smul.u32 2, %s25
        %v308 = vld [vmem:[%s266] sm:$0xff]
        %v309 = vld [vmem:[%s266 + $0x8] sm:$0xff]
        %v310 = vld [vmem:[#allocation6] sm:$0xff]
        %v311 = vld [vmem:[#allocation6 + $0x8] sm:$0xff]
        %v312 = vld [vmem:[#allocation6 + $0x10] sm:$0xff]
        %v313 = vld [vmem:[#allocation6 + $0x18] sm:$0xff]
        %v314 = vld [vmem:[#allocation6 + $0x20] sm:$0xff]
        %v315 = vld [vmem:[#allocation6 + $0x28] sm:$0xff]
        %v316 = vld [vmem:[#allocation6 + $0x30] sm:$0xff]
        %v317 = vld [vmem:[#allocation6 + $0x38] sm:$0xff]
        %v318 = vld [vmem:[#allocation6 + $0x40] sm:$0xff]
        %v319 = vld [vmem:[#allocation6 + $0x48] sm:$0xff]
        %v320 = vld [vmem:[#allocation6 + $0x50] sm:$0xff]
        %v321 = vld [vmem:[#allocation6 + $0x58] sm:$0xff]
        %v322 = vld [vmem:[#allocation6 + $0x60] sm:$0xff]
        %v323 = vld [vmem:[#allocation6 + $0x68] sm:$0xff]
        %v324 = vld [vmem:[#allocation6 + $0x70] sm:$0xff]
        %v325 = vld [vmem:[#allocation6 + $0x78] sm:$0xff]
        %v326 = vld [vmem:[#allocation6 + $0x80] sm:$0xff]
        %v327 = vld [vmem:[#allocation6 + $0x88] sm:$0xff]
        %v328 = vld [vmem:[#allocation6 + $0x90] sm:$0xff]
        %v329 = vld [vmem:[#allocation6 + $0x98] sm:$0xff]
        %v330 = vld [vmem:[#allocation6 + $0xa0] sm:$0xff]
        %v331 = vld [vmem:[#allocation6 + $0xa8] sm:$0xff]
        %v332 = vld [vmem:[#allocation6 + $0xb0] sm:$0xff]
        %v333 = vld [vmem:[#allocation6 + $0xb8] sm:$0xff]
        %v334 = vld [vmem:[#allocation6 + $0xc0] sm:$0xff]
        %v335 = vld [vmem:[#allocation6 + $0xc8] sm:$0xff]
        %v336 = vld [vmem:[#allocation6 + $0xd0] sm:$0xff]
        %v337 = vld [vmem:[#allocation6 + $0xd8] sm:$0xff]
        %v338 = vld [vmem:[#allocation6 + $0xe0] sm:$0xff]
        %v339 = vld [vmem:[#allocation6 + $0xe8] sm:$0xff]
        %v340 = vld [vmem:[#allocation6 + $0xf0] sm:$0xff]
        %v341 = vld [vmem:[#allocation6 + $0xf8] sm:$0xff]
        %v342 = vld [vmem:[%s2] sm:$0x3]
        %v344 = vperm.slane %v342, 0
        %v345 = vperm.slane %v342, 1
        %348 = vmatpush.msra.mxu0 %v340
        %349 = vmatpush.msra.mxu0 %v338
        %350 = vmatpush.msra.mxu0 %v336
        %351 = vmatpush.msra.mxu0 %v334
        %352 = vmatpush.msra.mxu0 %v332
        %353 = vmatpush.msra.mxu0 %v330
        %354 = vmatpush.msra.mxu0 %v328
        %355 = vmatpush.msra.mxu0 %v326
        %356 = vmatpush.msra.mxu0 %v324
        %357 = vmatpush.msra.mxu0 %v322
        %358 = vmatpush.msra.mxu0 %v320
        %359 = vmatpush.msra.mxu0 %v318
        %360 = vmatpush.msra.mxu0 %v316
        %361 = vmatpush.msra.mxu0 %v314
        %362 = vmatpush.msra.mxu0 %v312
        %363 = vmatpush.msra.mxu0 %v310
        %364 = vmatmul.f32.gmra.mxu0 %v308
        %v365 = vpop.f32.mrf.mxu0
        %v366 = vadd.f32 %v344, %v365
        %367 = vmatmul.f32.gmra.mxu0 %v309
        %v368 = vpop.f32.mrf.mxu0
        %v369 = vadd.f32 %v344, %v368
        %370 = vdwg.mxu0
        %371 = vmatpush.msra.mxu0 %v341
        %372 = vmatpush.msra.mxu0 %v339
        %373 = vmatpush.msra.mxu0 %v337
        %374 = vmatpush.msra.mxu0 %v335
        %375 = vmatpush.msra.mxu0 %v333
        %376 = vmatpush.msra.mxu0 %v331
        %377 = vmatpush.msra.mxu0 %v329
        %378 = vmatpush.msra.mxu0 %v327
        %379 = vmatpush.msra.mxu0 %v325
        %380 = vmatpush.msra.mxu0 %v323
        %381 = vmatpush.msra.mxu0 %v321
        %382 = vmatpush.msra.mxu0 %v319
        %383 = vmatpush.msra.mxu0 %v317
        %384 = vmatpush.msra.mxu0 %v315
        %385 = vmatpush.msra.mxu0 %v313
        %386 = vmatpush.msra.mxu0 %v311
        %387 = vmatmul.f32.gmra.mxu0 %v308
        %v388 = vpop.f32.mrf.mxu0
        %v389 = vadd.f32 %v345, %v388
        %390 = vmatmul.f32.gmra.mxu0 %v309
        %v391 = vpop.f32.mrf.mxu0
        %v392 = vadd.f32 %v345, %v391
        %393 = vdwg.mxu0
        %v394 = vmul.f32 %v366, 0.5
        %v395 = vmul.f32 %v389, 0.5
        %v396 = vmul.f32 %v369, 0.5
        %v397 = vmul.f32 %v392, 0.5
        %v398 = vmul.f32 %v366, 0.70710677
        %v399 = vmul.f32 %v389, 0.70710677
        %v400 = vmul.f32 %v369, 0.70710677
        %v401 = vmul.f32 %v392, 0.70710677
        %v402 = vmul.f32 %v398, %v398
        %v403 = vmin.f32 16.0, %v402
        %v404 = vmul.f32 %v403, 2.1237322e-06
        %v405 = vadd.f32 %v404, 0.00028619796
        %v406 = vmul.f32 %v403, %v405
        %v407 = vadd.f32 %v406, 0.0036580483
        %v408 = vmul.f32 %v403, %v407
        %v409 = vadd.f32 %v408, 0.05243302
        %v410 = vmul.f32 %v403, %v409
        %v411 = vadd.f32 %v410, 0.18741608
        %v412 = vmul.f32 %v403, %v411
        %v413 = vadd.f32 %v412, 1.1283791
        %v414 = vmul.f32 %v398, %v413
        %v415 = vmul.f32 %v403, 3.8918573e-05
        %v416 = vadd.f32 %v415, 0.001143296
        %v417 = vmul.f32 %v403, %v416
        %v418 = vadd.f32 %v417, 0.014752088
        %v419 = vmul.f32 %v403, %v418
        %v420 = vadd.f32 %v419, 0.112945676
        %v421 = vmul.f32 %v403, %v420
        %v422 = vadd.f32 %v421, 0.4994258
        %v423 = vmul.f32 %v403, %v422
        %v424 = vadd.f32 %v423, 1.0
        %v425 = vrcp.pop %v424
        %v426 = vmul.f32 %v424, %v425
        %v427 = vsub.f32 1.0, %v426
        %v428 = vmul.f32 %v425, %v427
        %v429 = vadd.f32 %v425, %v428
        %vm430 = vweird.f32 %v424
        %vm431 = vweird.f32 %v425
        %vm432 = vmor %vm430, %vm431
        %v433 = vsel %vm432, %v425, %v429
        %v434 = vand.u32 2147483647, %v424
        %vm435 = vcmp.eq.f32.partialorder %v434, 8.507059e+37
        %v436 = vand.u32 %v424, 2147483648
        %v437 = vor.u32 1.1754944e-38, %v436
        %v438 = vsel %vm435, %v437, %v433
        %v439 = vmul.f32 %v414, %v438
        %v440 = vmin.f32 %v439, 1.0
        %v441 = vmax.f32 %v440, -1.0
        %v442 = vmul.f32 %v399, %v399
        %v443 = vmin.f32 16.0, %v442
        %v444 = vmul.f32 %v443, 2.1237322e-06
        %v445 = vadd.f32 %v444, 0.00028619796
        %v446 = vmul.f32 %v443, %v445
        %v447 = vadd.f32 %v446, 0.0036580483
        %v448 = vmul.f32 %v443, %v447
        %v449 = vadd.f32 %v448, 0.05243302
        %v450 = vmul.f32 %v443, %v449
        %v451 = vadd.f32 %v450, 0.18741608
        %v452 = vmul.f32 %v443, %v451
        %v453 = vadd.f32 %v452, 1.1283791
        %v454 = vmul.f32 %v399, %v453
        %v455 = vmul.f32 %v443, 3.8918573e-05
        %v456 = vadd.f32 %v455, 0.001143296
        %v457 = vmul.f32 %v443, %v456
        %v458 = vadd.f32 %v457, 0.014752088
        %v459 = vmul.f32 %v443, %v458
        %v460 = vadd.f32 %v459, 0.112945676
        %v461 = vmul.f32 %v443, %v460
        %v462 = vadd.f32 %v461, 0.4994258
        %v463 = vmul.f32 %v443, %v462
        %v464 = vadd.f32 %v463, 1.0
        %v465 = vrcp.pop %v464
        %v466 = vmul.f32 %v464, %v465
        %v467 = vsub.f32 1.0, %v466
        %v468 = vmul.f32 %v465, %v467
        %v469 = vadd.f32 %v465, %v468
        %vm470 = vweird.f32 %v464
        %vm471 = vweird.f32 %v465
        %vm472 = vmor %vm470, %vm471
        %v473 = vsel %vm472, %v465, %v469
        %v474 = vand.u32 2147483647, %v464
        %vm475 = vcmp.eq.f32.partialorder %v474, 8.507059e+37
        %v476 = vand.u32 %v464, 2147483648
        %v477 = vor.u32 1.1754944e-38, %v476
        %v478 = vsel %vm475, %v477, %v473
        %v479 = vmul.f32 %v454, %v478
        %v480 = vmin.f32 %v479, 1.0
        %v481 = vmax.f32 %v480, -1.0
        %v482 = vmul.f32 %v400, %v400
        %v483 = vmin.f32 16.0, %v482
        %v484 = vmul.f32 %v483, 2.1237322e-06
        %v485 = vadd.f32 %v484, 0.00028619796
        %v486 = vmul.f32 %v483, %v485
        %v487 = vadd.f32 %v486, 0.0036580483
        %v488 = vmul.f32 %v483, %v487
        %v489 = vadd.f32 %v488, 0.05243302
        %v490 = vmul.f32 %v483, %v489
        %v491 = vadd.f32 %v490, 0.18741608
        %v492 = vmul.f32 %v483, %v491
        %v493 = vadd.f32 %v492, 1.1283791
        %v494 = vmul.f32 %v400, %v493
        %v495 = vmul.f32 %v483, 3.8918573e-05
        %v496 = vadd.f32 %v495, 0.001143296
        %v497 = vmul.f32 %v483, %v496
        %v498 = vadd.f32 %v497, 0.014752088
        %v499 = vmul.f32 %v483, %v498
        %v500 = vadd.f32 %v499, 0.112945676
        %v501 = vmul.f32 %v483, %v500
        %v502 = vadd.f32 %v501, 0.4994258
        %v503 = vmul.f32 %v483, %v502
        %v504 = vadd.f32 %v503, 1.0
        %v505 = vrcp.pop %v504
        %v506 = vmul.f32 %v504, %v505
        %v507 = vsub.f32 1.0, %v506
        %v508 = vmul.f32 %v505, %v507
        %v509 = vadd.f32 %v505, %v508
        %vm510 = vweird.f32 %v504
        %vm511 = vweird.f32 %v505
        %vm512 = vmor %vm510, %vm511
        %v513 = vsel %vm512, %v505, %v509
        %v514 = vand.u32 2147483647, %v504
        %vm515 = vcmp.eq.f32.partialorder %v514, 8.507059e+37
        %v516 = vand.u32 %v504, 2147483648
        %v517 = vor.u32 1.1754944e-38, %v516
        %v518 = vsel %vm515, %v517, %v513
        %v519 = vmul.f32 %v494, %v518
        %v520 = vmin.f32 %v519, 1.0
        %v521 = vmax.f32 %v520, -1.0
        %v522 = vmul.f32 %v401, %v401
        %v523 = vmin.f32 16.0, %v522
        %v524 = vmul.f32 %v523, 2.1237322e-06
        %v525 = vadd.f32 %v524, 0.00028619796
        %v526 = vmul.f32 %v523, %v525
        %v527 = vadd.f32 %v526, 0.0036580483
        %v528 = vmul.f32 %v523, %v527
        %v529 = vadd.f32 %v528, 0.05243302
        %v530 = vmul.f32 %v523, %v529
        %v531 = vadd.f32 %v530, 0.18741608
        %v532 = vmul.f32 %v523, %v531
        %v533 = vadd.f32 %v532, 1.1283791
        %v534 = vmul.f32 %v401, %v533
        %v535 = vmul.f32 %v523, 3.8918573e-05
        %v536 = vadd.f32 %v535, 0.001143296
        %v537 = vmul.f32 %v523, %v536
        %v538 = vadd.f32 %v537, 0.014752088
        %v539 = vmul.f32 %v523, %v538
        %v540 = vadd.f32 %v539, 0.112945676
        %v541 = vmul.f32 %v523, %v540
        %v542 = vadd.f32 %v541, 0.4994258
        %v543 = vmul.f32 %v523, %v542
        %v544 = vadd.f32 %v543, 1.0
        %v545 = vrcp.pop %v544
        %v546 = vmul.f32 %v544, %v545
        %v547 = vsub.f32 1.0, %v546
        %v548 = vmul.f32 %v545, %v547
        %v549 = vadd.f32 %v545, %v548
        %vm550 = vweird.f32 %v544
        %vm551 = vweird.f32 %v545
        %vm552 = vmor %vm550, %vm551
        %v553 = vsel %vm552, %v545, %v549
        %v554 = vand.u32 2147483647, %v544
        %vm555 = vcmp.eq.f32.partialorder %v554, 8.507059e+37
        %v556 = vand.u32 %v544, 2147483648
        %v557 = vor.u32 1.1754944e-38, %v556
        %v558 = vsel %vm555, %v557, %v553
        %v559 = vmul.f32 %v534, %v558
        %v560 = vmin.f32 %v559, 1.0
        %v561 = vmax.f32 %v560, -1.0
        %v562 = vadd.f32 %v441, 1.0
        %v563 = vadd.f32 %v481, 1.0
        %v564 = vadd.f32 %v521, 1.0
        %v565 = vadd.f32 %v561, 1.0
        %v566 = vmul.f32 %v394, %v562
        %v567 = vmul.f32 %v395, %v563
        %v568 = vmul.f32 %v396, %v564
        %v569 = vmul.f32 %v397, %v565
        %v570 = vld [vmem:[#allocation8] sm:$0xff]
        %v571 = vld [vmem:[#allocation8 + $0x8] sm:$0xff]
        %v572 = vld [vmem:[#allocation8 + $0x10] sm:$0xff]
        %v573 = vld [vmem:[#allocation8 + $0x18] sm:$0xff]
        %v574 = vld [vmem:[#allocation8 + $0x20] sm:$0xff]
        %v575 = vld [vmem:[#allocation8 + $0x28] sm:$0xff]
        %v576 = vld [vmem:[#allocation8 + $0x30] sm:$0xff]
        %v577 = vld [vmem:[#allocation8 + $0x38] sm:$0xff]
        %v578 = vld [vmem:[#allocation8 + $0x40] sm:$0xff]
        %v579 = vld [vmem:[#allocation8 + $0x48] sm:$0xff]
        %v580 = vld [vmem:[#allocation8 + $0x50] sm:$0xff]
        %v581 = vld [vmem:[#allocation8 + $0x58] sm:$0xff]
        %v582 = vld [vmem:[#allocation8 + $0x60] sm:$0xff]
        %v583 = vld [vmem:[#allocation8 + $0x68] sm:$0xff]
        %v584 = vld [vmem:[#allocation8 + $0x70] sm:$0xff]
        %v585 = vld [vmem:[#allocation8 + $0x78] sm:$0xff]
        %v586 = vld [vmem:[#allocation8 + $0x80] sm:$0xff]
        %v587 = vld [vmem:[#allocation8 + $0x88] sm:$0xff]
        %v588 = vld [vmem:[#allocation8 + $0x90] sm:$0xff]
        %v589 = vld [vmem:[#allocation8 + $0x98] sm:$0xff]
        %v590 = vld [vmem:[#allocation8 + $0xa0] sm:$0xff]
        %v591 = vld [vmem:[#allocation8 + $0xa8] sm:$0xff]
        %v592 = vld [vmem:[#allocation8 + $0xb0] sm:$0xff]
        %v593 = vld [vmem:[#allocation8 + $0xb8] sm:$0xff]
        %v594 = vld [vmem:[#allocation8 + $0xc0] sm:$0xff]
        %v595 = vld [vmem:[#allocation8 + $0xc8] sm:$0xff]
        %v596 = vld [vmem:[#allocation8 + $0xd0] sm:$0xff]
        %v597 = vld [vmem:[#allocation8 + $0xd8] sm:$0xff]
        %v598 = vld [vmem:[#allocation8 + $0xe0] sm:$0xff]
        %v599 = vld [vmem:[#allocation8 + $0xe8] sm:$0xff]
        %v600 = vld [vmem:[#allocation8 + $0xf0] sm:$0xff]
        %v601 = vld [vmem:[#allocation8 + $0xf8] sm:$0xff]
        %v602 = vld [vmem:[%s4] sm:$0x1]
        %v604 = vperm.slane %v602, 0
        %606 = vmatpush.msra.mxu0 %v585
        %607 = vmatpush.msra.mxu0 %v584
        %608 = vmatpush.msra.mxu0 %v583
        %609 = vmatpush.msra.mxu0 %v582
        %610 = vmatpush.msra.mxu0 %v581
        %611 = vmatpush.msra.mxu0 %v580
        %612 = vmatpush.msra.mxu0 %v579
        %613 = vmatpush.msra.mxu0 %v578
        %614 = vmatpush.msra.mxu0 %v577
        %615 = vmatpush.msra.mxu0 %v576
        %616 = vmatpush.msra.mxu0 %v575
        %617 = vmatpush.msra.mxu0 %v574
        %618 = vmatpush.msra.mxu0 %v573
        %619 = vmatpush.msra.mxu0 %v572
        %620 = vmatpush.msra.mxu0 %v571
        %621 = vmatpush.msra.mxu0 %v570
        %622 = vmatmul.f32.gmra.mxu0 %v566
        %v623 = vpop.f32.mrf.mxu0
        %v624 = vadd.f32 %v604, %v623
        %625 = vmatmul.f32.gmra.mxu0 %v568
        %v626 = vpop.f32.mrf.mxu0
        %v627 = vadd.f32 %v604, %v626
        %628 = vdwg.mxu0
        %629 = vmatpush.msra.mxu0 %v601
        %630 = vmatpush.msra.mxu0 %v600
        %631 = vmatpush.msra.mxu0 %v599
        %632 = vmatpush.msra.mxu0 %v598
        %633 = vmatpush.msra.mxu0 %v597
        %634 = vmatpush.msra.mxu0 %v596
        %635 = vmatpush.msra.mxu0 %v595
        %636 = vmatpush.msra.mxu0 %v594
        %637 = vmatpush.msra.mxu0 %v593
        %638 = vmatpush.msra.mxu0 %v592
        %639 = vmatpush.msra.mxu0 %v591
        %640 = vmatpush.msra.mxu0 %v590
        %641 = vmatpush.msra.mxu0 %v589
        %642 = vmatpush.msra.mxu0 %v588
        %643 = vmatpush.msra.mxu0 %v587
        %644 = vmatpush.msra.mxu0 %v586
        %645 = vmatmul.f32.gmra.mxu0 %v567
        %v646 = vpop.f32.mrf.mxu0
        %v647 = vadd.f32 %v624, %v646
        %648 = vmatmul.f32.gmra.mxu0 %v569
        %v649 = vpop.f32.mrf.mxu0
        %v650 = vadd.f32 %v627, %v649
        %651 = vdwg.mxu0
        %s652 = sld [smem:[#allocation2]]
        %v653 = vstv %s652
        %v654 = vmul.f32 %v647, %v653
        %v655 = vmul.f32 %v650, %v653
        %656 = vst [vmem:[%s305] sm:$0xff] %v654
        %657 = vst [vmem:[%s305 + $0x8] sm:$0xff] %v655
        %s658 = sand.u32 %s164, 1
        %s659 = scalar_lea.sflag [#allocation5], %s658
        %s660 = sand.u32 %s164, 1
        %s661 = smul.addr %s660, 16
        %s662 = scalar_lea.vmem [#allocation9], %s661
        // Predicated region
        $region57: #{tpu_custom_call.1} parent=43 // pred_check
          %p663 = pneg %p174
        $region58: #{tpu_custom_call.1} parent=43 // pred_check_branch
          %665 = sbr.rel (%p663) target = $region60
        $region59: #{tpu_custom_call.1} parent=43 // pred_region
          %s666 = smul.u32 2, %s25
          %668 = vsyncadd %s659, 0
          %s669 = smul.addr %s666, 8
          %s670 = scalar_lea.hbm %s6, %s669
          %s671 = sshll.u32 %s662, 4
          %s672 = int_to_ptr.vmem [resolvable:$true] %s671
          %s673 = sshll.u32 %s670, 4
          %s674 = int_to_ptr.hbm [resolvable:$true] %s673
          %679 = dma.vmem_to_hbm [thread:$0]  %s672, 256, %s674, %s659, 128, 128, 8
        $region60: #{tpu_custom_call.1} parent=43 // pred_fallthru
          _
      $region44: #{tpu_custom_call.1} parent=5 // pred_fallthru
        _
      %p680 = scmp.le.s32.totalorder 2, %s20
      // Predicated region
      $region61: #{tpu_custom_call.1} parent=5 // pred_check
        %p681 = pneg %p680
      $region62: #{tpu_custom_call.1} parent=5 // pred_check_branch
        %683 = sbr.rel (%p681) target = $region64
      $region63: #{tpu_custom_call.1} parent=5 // pred_region
        %s684 = ssub.s32 %s20, 2
        // Predicated region
        $region65: #{tpu_custom_call.1} parent=63 // pred_check
          %p685 = pneg %p180
        $region66: #{tpu_custom_call.1} parent=63 // pred_check_branch
          %687 = sbr.rel (%p685) target = $region68
        $region67: #{tpu_custom_call.1} parent=63 // pred_region
          %s688 = sand.u32 %s165, 1
          %s689 = scalar_lea.sflag [#allocation5], %s688
          %s690 = sand.u32 %s165, 1
          %s691 = smul.addr %s690, 16
          %s692 = scalar_lea.vmem [#allocation9], %s691
          %694 = dma.done %s689, 256
        $region68: #{tpu_custom_call.1} parent=63 // pred_fallthru
          _
      $region64: #{tpu_custom_call.1} parent=5 // pred_fallthru
        _
    $region6: #{tpu_custom_call.1} parent=1 // loop_footer
      %s24 = sadd.s32 1, %s20
    $region7: #{tpu_custom_call.1} parent=1 // loop_footer_branch
      %19 = sbr.rel target = $region3
    $region8: #{tpu_custom_call.1} parent=1 // loop_exit
      _
    %695 = vsyncpa [#allocation4], 1
    %s696 = scalar_lea.sflag [#allocation4], 1
    %697 = vsyncpa %s696, 1
    %698 = vsyncpa [#allocation7], 1
    %699 = vsyncpa [#allocation5], 1
    %s700 = scalar_lea.sflag [#allocation5], 1
    %701 = vsyncpa %s700, 1

</llo_original>
